<compile_context>
chip_gen: v7x
topology: tpu7x:2x2x1
jax: 0.10.0
libtpu: 0.0.40
codegen_flags: <defaults>
</compile_context>

<pallas_src>
import math

import numpy as np
import jax
import jax.numpy as jnp
from jax.experimental import pallas as pl
from jax.experimental.pallas import tpu as pltpu

D_k = D_v = 64                              # module-level constants (match the PyTorch spec)
_SCALE = float(1.0 / math.sqrt(D_k))


def _sdpa_kernel(q_ref, k_ref, v_ref, mask_ref, ctx_ref, attn_ref):
    # Block shapes:
    #   q_ref    : (G, TQ, D_k)            G heads x TQ query rows
    #   k_ref    : (G, S_k, D_k)           resident across the q-tile grid axis
    #   v_ref    : (G, S_k, D_v)           resident across the q-tile grid axis
    #   mask_ref : (1 or G, TQ, S_k)       int8, nonzero == masked
    #   ctx_ref  : (1, TQ, G*D_v) lane-packed  or  (G, TQ, D_v) unpacked
    #   attn_ref : (G, TQ, S_k)
    G = q_ref.shape[0]
    d_v = v_ref.shape[-1]
    lane_packed_ctx = ctx_ref.shape[-1] != d_v

    q = q_ref[...]
    k = k_ref[...]
    v = v_ref[...]
    m = mask_ref[...]

    # Fold 1/sqrt(D_k) into Q (TQ x D elements) instead of scaling TQ x S_k scores.
    # (For bf16 inputs this adds one bf16 rounding step vs the torch reference;
    #  well inside the stated tolerance.)
    q = q * jnp.asarray(_SCALE, dtype=q.dtype)

    # scores = Q @ K^T: contraction over D without materializing a transposed K;
    # operands stay in native dtype (bf16 stays bf16), accumulation in f32.
    scores = jnp.einsum("gqd,gkd->gqk", q, k, preferred_element_type=jnp.float32)

    # masked_fill_(attn_mask, -1e9).  Kept as compare+select (not an additive -1e9
    # bias) so fully-masked rows reproduce the reference softmax exactly.
    scores = jnp.where(m != 0, jnp.float32(-1.0e9), scores)

    # Numerically stable softmax along the key axis.
    # TODO(synk): if a v7x bundle dump shows the EUP as the binding slot, compute the
    #             exp in bf16 for bf16 runs (not on v5e: no bf16 EUP).
    row_max = jnp.max(scores, axis=-1, keepdims=True)
    ex = jnp.exp(scores - row_max)
    denom = jnp.sum(ex, axis=-1, keepdims=True)
    # Approx reciprocal (EUP vrcp, otherwise-idle slot): attn rows sum to 1 only
    # to ~1e-3 -- documented in the wrapper docstring.
    attn = ex * pl.reciprocal(denom, approx=True)

    attn_ref[...] = attn.astype(attn_ref.dtype)

    # context = attn @ V
    attn_v = attn.astype(v.dtype)
    if lane_packed_ctx:
        # Lane-dense ctx: build one (TQ, G*D_v) slab (last dim >= 128 -> unmasked
        # vst + dense writeback DMA).  Per-head 2-D dots + lane concatenation give
        # the packed layout directly, no in-kernel transpose needed.
        cols = [
            jnp.dot(attn_v[g], v[g], preferred_element_type=jnp.float32)
            for g in range(G)
        ]
        packed = jnp.concatenate(cols, axis=-1)              # (TQ, G*D_v)
        ctx_ref[...] = packed[None].astype(ctx_ref.dtype)
    else:
        ctx = jnp.einsum("gqk,gkd->gqd", attn_v, v,
                         preferred_element_type=jnp.float32)
        ctx_ref[...] = ctx.astype(ctx_ref.dtype)


def _vmem_plan():
    """Chip-aware (scoped-VMEM limit, per-step DMA-block budget), in bytes."""
    MiB = 1024 * 1024
    try:
        cap = int(pltpu.get_tpu_info().vmem_capacity_bytes)
    except Exception:
        cap = 128 * MiB                       # assume v5e/v6e if the query fails
    if cap >= 100 * MiB:                      # v5e / v6e: 128 MiB physical VMEM
        return 64 * MiB, 10 * MiB
    # v7x: 64 MiB physical per TensorCore -> stay well under it.
    return min(44 * MiB, (cap * 7) // 10), 7 * MiB


def _choose_tiles(BH, S_q, S_k, d_k, d_v, itemsize, attn_itemsize, mask_per_head,
                  vmem_limit, dma_budget):
    """Pick (heads per step G, query tile TQ).

    Feasibility: double-buffered DMA blocks plus single-buffered f32 intermediates
    fit under the scoped-VMEM limit, and the DMA'd portion of one step stays under
    `dma_budget` so 2-deep pipelining survives.
    Objective: minimize modelled HBM traffic (K/V re-read per q-tile, mask re-read
    per head group), then maximize per-step work (amortize ~0.35us/step overhead).
    """
    MiB = 1024 * 1024

    def dma_bytes(g, tq):
        qb = g * tq * d_k * itemsize
        kvb = g * S_k * (d_k + d_v) * itemsize
        mb = (g if mask_per_head else 1) * tq * S_k            # int8 mask
        ctxb = g * tq * d_v * itemsize
        attnb = g * tq * S_k * attn_itemsize
        return qb + kvb + mb + ctxb + attnb

    def temps_bytes(g, tq):
        # f32 scores / exp / probs + small ctx accumulators, single-buffered.
        return 3 * g * tq * S_k * 4 + g * tq * d_v * 4

    def hbm_traffic(g, tq):
        q_steps = -(-S_q // tq)
        kv = q_steps * BH * S_k * (d_k + d_v) * itemsize       # re-read per q-tile
        mask = (BH if mask_per_head else (BH // g)) * S_q * S_k
        fixed = BH * S_q * (d_k + d_v) * itemsize + BH * S_q * S_k * attn_itemsize
        return kv + mask + fixed

    g_cands = [g for g in (16, 8, 4, 2, 1) if BH % g == 0]
    # Multiples of 32 that divide S_q (safe for int8 tiling); full S_q always legal.
    tq_cands = sorted({t for t in range(32, min(S_q, 2048) + 1, 32) if S_q % t == 0}
                      | {S_q})

    best, fallback = None, None
    for g in g_cands:
        for tq in tq_cands:
            d = dma_bytes(g, tq)
            if fallback is None or d < fallback[2]:
                fallback = (g, tq, d)
            fits = (d <= dma_budget
                    and 2 * d + temps_bytes(g, tq) + 4 * MiB <= vmem_limit)
            if not fits:
                continue
            key = (hbm_traffic(g, tq), -(g * tq), -tq)
            if best is None or key < best[0]:
                best = (key, g, tq)
    if best is not None:
        return best[1], best[2]
    # Nothing fits the budget (huge S_k): take the smallest step and let the
    # compiler shrink pipelining as needed.
    return fallback[0], fallback[1]


def scaled_dot_product_attention(Q, K, V, attn_mask, *, attn_dtype=None,
                                 pack_ctx_lanes=None):
    """Q, K: [BH, S, D_k]; V: [BH, S, D_v].
    attn_mask: [S_q, S_k], [1, S_q, S_k], [B, S_q, S_k] (B divides BH, batch-major
    head layout) or [BH, S_q, S_k]; nonzero/True == masked.
    Returns (context [BH, S_q, D_v], attn [BH, S_q, S_k]).

    attn_dtype: dtype of the returned attention probabilities (default Q.dtype,
    matching the torch module).  Passing jnp.bfloat16 halves the dominant HBM
    writeback stream for f32 runs if downstream consumers tolerate it.
    Note: the softmax uses an approximate EUP reciprocal, so attn rows sum to 1
    only to ~1e-3.
    """
    BH, S_q, d_k = Q.shape
    _, S_k, _ = K.shape
    d_v = V.shape[-1]
    attn_dtype = Q.dtype if attn_dtype is None else attn_dtype

    mask = jnp.asarray(attn_mask)
    if mask.ndim == 2:
        mask = mask[None]
    if mask.shape[0] not in (1, BH):
        if BH % mask.shape[0] == 0:
            # Per-batch mask with BH = batch*heads laid out batch-major:
            # repeat each batch's mask across its heads explicitly.
            mask = jnp.repeat(mask, BH // mask.shape[0], axis=0)
        else:
            mask = jnp.broadcast_to(mask, (BH, S_q, S_k))
    mask_per_head = mask.shape[0] == BH and BH != 1
    mask_i8 = mask.astype(jnp.int8)

    itemsize = jnp.dtype(Q.dtype).itemsize
    attn_itemsize = jnp.dtype(attn_dtype).itemsize
    vmem_limit, dma_budget = _vmem_plan()
    G, TQ = _choose_tiles(BH, S_q, S_k, d_k, d_v, itemsize, attn_itemsize,
                          mask_per_head, vmem_limit, dma_budget)
    grid = (BH // G, S_q // TQ)

    if pack_ctx_lanes is None:
        pack_ctx_lanes = (G >= 2) and (G * d_v >= 128)

    if mask_per_head:
        mask_spec = pl.BlockSpec((G, TQ, S_k), lambda g, q: (g, q, 0))
    else:
        # Broadcast mask: one small int8 slab, shared by every head group.
        mask_spec = pl.BlockSpec((1, TQ, S_k), lambda g, q: (0, q, 0))

    if pack_ctx_lanes:
        ctx_shape = jax.ShapeDtypeStruct((BH // G, S_q, G * d_v), Q.dtype)
        ctx_spec = pl.BlockSpec((1, TQ, G * d_v), lambda g, q: (g, q, 0))
    else:
        ctx_shape = jax.ShapeDtypeStruct((BH, S_q, d_v), Q.dtype)
        ctx_spec = pl.BlockSpec((G, TQ, d_v), lambda g, q: (g, q, 0))

    # v7x: split the megacore on the head-group axis when possible -- K/V blocks are
    # resident across the q axis, so splitting on q would re-DMA them per TensorCore.
    dim_sem = ("parallel", "arbitrary") if grid[0] > 1 else ("parallel", "parallel")

    ctx_raw, attn = pl.pallas_call(
        _sdpa_kernel,
        out_shape=(
            ctx_shape,
            jax.ShapeDtypeStruct((BH, S_q, S_k), attn_dtype),
        ),
        grid_spec=pltpu.PrefetchScalarGridSpec(
            num_scalar_prefetch=0,
            grid=grid,
            in_specs=[
                pl.BlockSpec((G, TQ, d_k), lambda g, q: (g, q, 0)),
                pl.BlockSpec((G, S_k, d_k), lambda g, q: (g, 0, 0)),   # resident over q
                pl.BlockSpec((G, S_k, d_v), lambda g, q: (g, 0, 0)),   # resident over q
                mask_spec,
            ],
            out_specs=[
                ctx_spec,
                # TODO(synk): if profiling shows exposed attn-writeback DMA at step
                #             boundaries, add pipeline_mode=pl.Buffered(3) here and
                #             charge the extra TQ*S_k buffer to the VMEM budget.
                pl.BlockSpec((G, TQ, S_k), lambda g, q: (g, q, 0)),
            ],
        ),
        compiler_params=pltpu.CompilerParams(
            dimension_semantics=dim_sem,
            vmem_limit_bytes=vmem_limit,
        ),
    )(Q, K, V, mask_i8)

    if pack_ctx_lanes:
        # Undo the lane-packed layout: (BH//G, S_q, G*d_v) -> (BH, S_q, d_v).
        # One extra ctx-sized relayout in XLA, paid for by dense stores in the kernel.
        ctx = (ctx_raw.reshape(BH // G, S_q, G, d_v)
                      .transpose(0, 2, 1, 3)
                      .reshape(BH, S_q, d_v))
    else:
        ctx = ctx_raw
    return ctx, attn


def _reference(Q, K, V, attn_mask):
    scores = jnp.einsum("bqd,bkd->bqk", Q, K) / math.sqrt(D_k)
    scores = jnp.where(attn_mask, -1.0e9, scores)
    attn = jax.nn.softmax(scores, axis=-1)
    ctx = jnp.einsum("bqk,bkd->bqd", attn, V)
    return ctx, attn


if __name__ == "__main__":
    key = jax.random.PRNGKey(0)
    batch, heads, seq = 2, 2, 8
    BH = batch * heads

    kq, kk, kv = jax.random.split(key, 3)
    Q = jax.random.normal(kq, (BH, seq, D_k), dtype=jnp.float32)
    K = jax.random.normal(kk, (BH, seq, D_k), dtype=jnp.float32)
    V = jax.random.normal(kv, (BH, seq, D_v), dtype=jnp.float32)

    # Causal mask (True == masked).  Passed as a single [S, S] slab so the kernel
    # streams one int8 copy instead of an int32 [BH, S, S] tensor.
    causal = jnp.triu(jnp.ones((seq, seq), dtype=jnp.bool_), k=1)

    ctx, attn = scaled_dot_product_attention(Q, K, V, causal)
    jax.block_until_ready((ctx, attn))

    mask_full = jnp.broadcast_to(causal, (BH, seq, seq))
    ctx_ref, attn_ref = _reference(Q, K, V, mask_full)
    # approx reciprocal (EUP vrcp) in the softmax -> slightly looser tolerance.
    np.testing.assert_allclose(np.asarray(ctx), np.asarray(ctx_ref), rtol=2e-3, atol=2e-3)
    np.testing.assert_allclose(np.asarray(attn), np.asarray(attn_ref), rtol=2e-3, atol=2e-3)

    print("KERNEL_OK")
</pallas_src>

<mosaic_0001>
module attributes {stable_mosaic.version = 11 : i64} {
  func.func @_sdpa_kernel(%arg0: i32, %arg1: i32, %arg2: memref<4x8x64xf32, #tpu.memory_space<vmem>>, %arg3: memref<4x8x64xf32, #tpu.memory_space<vmem>>, %arg4: memref<4x8x64xf32, #tpu.memory_space<vmem>>, %arg5: memref<1x8x8xi8, #tpu.memory_space<vmem>>, %arg6: memref<1x8x256xf32, #tpu.memory_space<vmem>>, %arg7: memref<4x8x8xf32, #tpu.memory_space<vmem>>) attributes {dimension_semantics = [#tpu.dimension_semantics<parallel>, #tpu.dimension_semantics<parallel>], iteration_bounds = array<i64: 1, 1>, scalar_prefetch = 0 : i64, scratch_operands = 0 : i64, tpu.core_type = #tpu.core_type<tc>, window_params = [{transform_indices = @transform_0, window_bounds = array<i64: 4, 8, 64>}, {transform_indices = @transform_1, window_bounds = array<i64: 4, 8, 64>}, {transform_indices = @transform_2, window_bounds = array<i64: 4, 8, 64>}, {transform_indices = @transform_3, window_bounds = array<i64: 1, 8, 8>}, {transform_indices = @transform_4, window_bounds = array<i64: 1, 8, 256>}, {transform_indices = @transform_5, window_bounds = array<i64: 4, 8, 8>}]} {
    %c0 = arith.constant 0 : index
    %c0_0 = arith.constant 0 : index
    %c0_1 = arith.constant 0 : index
    %0 = vector.load %arg2[%c0, %c0_0, %c0_1] : memref<4x8x64xf32, #tpu.memory_space<vmem>>, vector<4x8x64xf32>
    %c0_2 = arith.constant 0 : index
    %c0_3 = arith.constant 0 : index
    %c0_4 = arith.constant 0 : index
    %1 = vector.load %arg3[%c0_2, %c0_3, %c0_4] : memref<4x8x64xf32, #tpu.memory_space<vmem>>, vector<4x8x64xf32>
    %c0_5 = arith.constant 0 : index
    %c0_6 = arith.constant 0 : index
    %c0_7 = arith.constant 0 : index
    %2 = vector.load %arg4[%c0_5, %c0_6, %c0_7] : memref<4x8x64xf32, #tpu.memory_space<vmem>>, vector<4x8x64xf32>
    %c0_8 = arith.constant 0 : index
    %c0_9 = arith.constant 0 : index
    %c0_10 = arith.constant 0 : index
    %3 = vector.load %arg5[%c0_8, %c0_9, %c0_10] : memref<1x8x8xi8, #tpu.memory_space<vmem>>, vector<1x8x8xi8>
    %cst = arith.constant 1.250000e-01 : f32
    %4 = vector.broadcast %cst : f32 to vector<4x8x64xf32>
    %5 = arith.mulf %0, %4 : vector<4x8x64xf32>
    "tpu.trace_start"() <{level = 10 : i32, message = "gqd,gkd->gqk"}> : () -> ()
    %cst_11 = arith.constant dense<0.000000e+00> : vector<4x8x8xf32>
    %6 = tpu.matmul %5, %1, %cst_11 {dimension_numbers = #tpu.dot_dimension_numbers<[2], [2], [1], [1], [0, 0, 0, 1, 1, 1], [0], [0]>} : vector<4x8x64xf32>, vector<4x8x64xf32>, vector<4x8x8xf32> -> vector<4x8x8xf32>
    %c0_i8 = arith.constant 0 : i8
    "tpu.trace_stop"() : () -> ()
    %7 = vector.broadcast %c0_i8 : i8 to vector<1x8x8xi8>
    %8 = arith.cmpi ne, %3, %7 : vector<1x8x8xi8>
    %cst_12 = arith.constant -1.000000e+09 : f32
    %9 = vector.shape_cast %8 : vector<1x8x8xi1> to vector<1x8x8xi1>
    %10 = vector.broadcast %9 : vector<1x8x8xi1> to vector<4x8x8xi1>
    %11 = vector.broadcast %cst_12 : f32 to vector<4x8x8xf32>
    %12 = arith.select %10, %11, %6 : vector<4x8x8xi1>, vector<4x8x8xf32>
    %cst_13 = arith.constant dense<0xFF800000> : vector<4x8xf32>
    %13 = vector.multi_reduction <maximumf>, %12, %cst_13 [2] : vector<4x8x8xf32> to vector<4x8xf32>
    %14 = vector.shape_cast %13 : vector<4x8xf32> to vector<4x8x1xf32>
    %15 = vector.broadcast %14 : vector<4x8x1xf32> to vector<4x8x8xf32>
    %16 = arith.subf %12, %15 : vector<4x8x8xf32>
    %17 = math.exp %16 : vector<4x8x8xf32>
    %cst_14 = arith.constant dense<0.000000e+00> : vector<4x8xf32>
    %18 = vector.multi_reduction <add>, %17, %cst_14 [2] : vector<4x8x8xf32> to vector<4x8xf32>
    %19 = vector.shape_cast %18 : vector<4x8xf32> to vector<4x8x1xf32>
    %20 = tpu.reciprocal %19 {approx = true} : vector<4x8x1xf32> -> vector<4x8x1xf32>
    %21 = vector.broadcast %20 : vector<4x8x1xf32> to vector<4x8x8xf32>
    %22 = arith.mulf %17, %21 : vector<4x8x8xf32>
    %c0_15 = arith.constant 0 : index
    %c0_16 = arith.constant 0 : index
    %c0_17 = arith.constant 0 : index
    %23 = vector.load %arg7[%c0_15, %c0_16, %c0_17] : memref<4x8x8xf32, #tpu.memory_space<vmem>>, vector<4x8x8xf32>
    tpu.vector_store %arg7[%c0_15, %c0_16, %c0_17], %22 {strides = array<i32>} : memref<4x8x8xf32, #tpu.memory_space<vmem>>, vector<4x8x8xf32>,
    %24 = vector.extract_strided_slice %22 {offsets = [0, 0, 0], sizes = [1, 8, 8], strides = [1, 1, 1]} : vector<4x8x8xf32> to vector<1x8x8xf32>
    %25 = vector.shape_cast %24 : vector<1x8x8xf32> to vector<8x8xf32>
    %26 = vector.extract_strided_slice %2 {offsets = [0, 0, 0], sizes = [1, 8, 64], strides = [1, 1, 1]} : vector<4x8x64xf32> to vector<1x8x64xf32>
    %27 = vector.shape_cast %26 : vector<1x8x64xf32> to vector<8x64xf32>
    %cst_18 = arith.constant dense<0.000000e+00> : vector<8x64xf32>
    %28 = tpu.matmul %25, %27, %cst_18 {dimension_numbers = #tpu.dot_dimension_numbers<[1], [0], [0], [1], [0, 0, 1, 1], [], []>} : vector<8x8xf32>, vector<8x64xf32>, vector<8x64xf32> -> vector<8x64xf32>
    %29 = vector.extract_strided_slice %22 {offsets = [1, 0, 0], sizes = [1, 8, 8], strides = [1, 1, 1]} : vector<4x8x8xf32> to vector<1x8x8xf32>
    %30 = vector.shape_cast %29 : vector<1x8x8xf32> to vector<8x8xf32>
    %31 = vector.extract_strided_slice %2 {offsets = [1, 0, 0], sizes = [1, 8, 64], strides = [1, 1, 1]} : vector<4x8x64xf32> to vector<1x8x64xf32>
    %32 = vector.shape_cast %31 : vector<1x8x64xf32> to vector<8x64xf32>
    %cst_19 = arith.constant dense<0.000000e+00> : vector<8x64xf32>
    %33 = tpu.matmul %30, %32, %cst_19 {dimension_numbers = #tpu.dot_dimension_numbers<[1], [0], [0], [1], [0, 0, 1, 1], [], []>} : vector<8x8xf32>, vector<8x64xf32>, vector<8x64xf32> -> vector<8x64xf32>
    %34 = vector.extract_strided_slice %22 {offsets = [2, 0, 0], sizes = [1, 8, 8], strides = [1, 1, 1]} : vector<4x8x8xf32> to vector<1x8x8xf32>
    %35 = vector.shape_cast %34 : vector<1x8x8xf32> to vector<8x8xf32>
    %36 = vector.extract_strided_slice %2 {offsets = [2, 0, 0], sizes = [1, 8, 64], strides = [1, 1, 1]} : vector<4x8x64xf32> to vector<1x8x64xf32>
    %37 = vector.shape_cast %36 : vector<1x8x64xf32> to vector<8x64xf32>
    %cst_20 = arith.constant dense<0.000000e+00> : vector<8x64xf32>
    %38 = tpu.matmul %35, %37, %cst_20 {dimension_numbers = #tpu.dot_dimension_numbers<[1], [0], [0], [1], [0, 0, 1, 1], [], []>} : vector<8x8xf32>, vector<8x64xf32>, vector<8x64xf32> -> vector<8x64xf32>
    %39 = vector.extract_strided_slice %22 {offsets = [3, 0, 0], sizes = [1, 8, 8], strides = [1, 1, 1]} : vector<4x8x8xf32> to vector<1x8x8xf32>
    %40 = vector.shape_cast %39 : vector<1x8x8xf32> to vector<8x8xf32>
    %41 = vector.extract_strided_slice %2 {offsets = [3, 0, 0], sizes = [1, 8, 64], strides = [1, 1, 1]} : vector<4x8x64xf32> to vector<1x8x64xf32>
    %42 = vector.shape_cast %41 : vector<1x8x64xf32> to vector<8x64xf32>
    %cst_21 = arith.constant dense<0.000000e+00> : vector<8x64xf32>
    %43 = tpu.matmul %40, %42, %cst_21 {dimension_numbers = #tpu.dot_dimension_numbers<[1], [0], [0], [1], [0, 0, 1, 1], [], []>} : vector<8x8xf32>, vector<8x64xf32>, vector<8x64xf32> -> vector<8x64xf32>
    %44 = tpu.concatenate %28, %33, %38, %43 in 1 : vector<8x64xf32>, vector<8x64xf32>, vector<8x64xf32>, vector<8x64xf32> -> vector<8x256xf32>
    %45 = vector.shape_cast %44 : vector<8x256xf32> to vector<1x8x256xf32>
    %c0_22 = arith.constant 0 : index
    %c0_23 = arith.constant 0 : index
    %c0_24 = arith.constant 0 : index
    %46 = vector.load %arg6[%c0_22, %c0_23, %c0_24] : memref<1x8x256xf32, #tpu.memory_space<vmem>>, vector<1x8x256xf32>
    tpu.vector_store %arg6[%c0_22, %c0_23, %c0_24], %45 {strides = array<i32>} : memref<1x8x256xf32, #tpu.memory_space<vmem>>, vector<1x8x256xf32>,
    return
  }
  func.func @transform_0(%arg0: i32, %arg1: i32) -> (i32, i32, i32) {
    %c0_i32 = arith.constant 0 : i32
    %c0_i32_0 = arith.constant 0 : i32
    return %arg0, %arg1, %c0_i32 : i32, i32, i32
  }
  func.func @transform_1(%arg0: i32, %arg1: i32) -> (i32, i32, i32) {
    %c0_i32 = arith.constant 0 : i32
    %c0_i32_0 = arith.constant 0 : i32
    %c0_i32_1 = arith.constant 0 : i32
    return %arg0, %c0_i32, %c0_i32_0 : i32, i32, i32
  }
  func.func @transform_2(%arg0: i32, %arg1: i32) -> (i32, i32, i32) {
    %c0_i32 = arith.constant 0 : i32
    %c0_i32_0 = arith.constant 0 : i32
    %c0_i32_1 = arith.constant 0 : i32
    return %arg0, %c0_i32, %c0_i32_0 : i32, i32, i32
  }
  func.func @transform_3(%arg0: i32, %arg1: i32) -> (i32, i32, i32) {
    %c0_i32 = arith.constant 0 : i32
    %c0_i32_0 = arith.constant 0 : i32
    %c0_i32_1 = arith.constant 0 : i32
    return %c0_i32, %arg1, %c0_i32_0 : i32, i32, i32
  }
  func.func @transform_4(%arg0: i32, %arg1: i32) -> (i32, i32, i32) {
    %c0_i32 = arith.constant 0 : i32
    %c0_i32_0 = arith.constant 0 : i32
    return %arg0, %arg1, %c0_i32 : i32, i32, i32
  }
  func.func @transform_5(%arg0: i32, %arg1: i32) -> (i32, i32, i32) {
    %c0_i32 = arith.constant 0 : i32
    %c0_i32_0 = arith.constant 0 : i32
    return %arg0, %arg1, %c0_i32 : i32, i32, i32
  }
}

</mosaic_0001>

<llo_original>
// kernel: tpu_custom_call.1
$region0: #{tpu_custom_call.1}
  #allocation0 [shape = 'u32[]', space=smem, size = 0x4, offset = 0x4, fixed_abs, tag = 'smem constant byte address 0x4 - core index']
  #allocation1 [shape = 'u32[144,128]{1,0:T(1,128)}', space=vmem, size = 0x12000, scoped, tag = 'internal scratch']
  %s0 = inlined_call_operand.hbm [shape: f32[4,8,64], index: 0, kind: input, shape index: {}]
  %s1 = inlined_call_operand.hbm [shape: f32[4,8,64], index: 1, kind: input, shape index: {}]
  %s2 = inlined_call_operand.hbm [shape: f32[4,8,64], index: 2, kind: input, shape index: {}]
  %s3 = inlined_call_operand.hbm [shape: s8[1,8,8], index: 3, kind: input, shape index: {}]
  %s4 = inlined_call_operand.hbm [shape: f32[1,8,256], index: 4, kind: output, shape index: {0}]
  %s5 = inlined_call_operand.hbm [shape: f32[4,8,8], index: 5, kind: output, shape index: {1}]
  %6 = xla_tuple %s4, %s5
  %s7 = sld [smem:[#allocation0]]
  $region50: #{tpu_custom_call.1} parent=0
    _
  %s9 = ssub.s32 1, %s7
  %s10 = scalar_select 0, %s9, %s7
  $region1: #{tpu_custom_call.1} parent=0
    #allocation2 [shape = 'u8[16384]{0}', space=vmem, size = 0x4000, scoped, tag = 'input window, operand 0, single buffered']
    #allocation3 [shape = 's32[1]{0}', space=sflag, size = 0x4, scoped, tag = 'scoped memory for tpu_custom_call.1']
    #allocation4 [shape = 's32[1]{0}', space=sflag, size = 0x4, scoped, tag = 'scoped memory for tpu_custom_call.1']
    #allocation5 [shape = 'u8[16384]{0}', space=vmem, size = 0x4000, scoped, tag = 'input window, operand 1, single buffered']
    #allocation6 [shape = 's32[1]{0}', space=sflag, size = 0x4, scoped, tag = 'scoped memory for tpu_custom_call.1']
    #allocation7 [shape = 'u8[16384]{0}', space=vmem, size = 0x4000, scoped, tag = 'input window, operand 2, single buffered']
    #allocation8 [shape = 'u8[1024]{0}', space=vmem, size = 0x400, scoped, tag = 'input window, operand 3, single buffered']
    #allocation9 [shape = 's32[1]{0}', space=sflag, size = 0x4, scoped, tag = 'scoped memory for tpu_custom_call.1']
    #allocation10 [shape = 'u8[8192]{0}', space=vmem, size = 0x2000, scoped, tag = 'output window, operand 0, single buffered']
    #allocation11 [shape = 'u8[16384]{0}', space=vmem, size = 0x4000, scoped, tag = 'output window, operand 1, single buffered']
    #allocation12 [shape = 's32[1]{0}', space=sflag, size = 0x4, scoped, tag = 'scoped memory for tpu_custom_call.1']
    %11 = vsyncpa [#allocation3], 0
    %12 = vsyncpa [#allocation6], 0
    %13 = vsyncpa [#allocation9], 0
    %14 = vsyncpa [#allocation4], 0
    %15 = vsyncpa [#allocation12], 0
    // Predicated region
    $region2: #{tpu_custom_call.1} parent=1 // pred_check
      _
    $region3: #{tpu_custom_call.1} parent=1 // pred_check_branch
      %17 = sbr.rel (0) target = $region5
    $region4: #{tpu_custom_call.1} parent=1 // pred_region
      %s19 = ssub.s32 512, 512
      %20 = vsyncadd [#allocation3], %s19
      %s21 = sshll.u32 [#allocation2], 4
      %s22 = int_to_ptr.vmem [resolvable:$true] %s21
      %27 = dma.hbm_to_vmem [thread:$0]  %s0, 512, %s22, [#allocation3], 128, 128, 8
    $region5: #{tpu_custom_call.1} parent=1 // pred_fallthru
      _
    // Predicated region
    $region6: #{tpu_custom_call.1} parent=1 // pred_check
      _
    $region7: #{tpu_custom_call.1} parent=1 // pred_check_branch
      %29 = sbr.rel (0) target = $region9
    $region8: #{tpu_custom_call.1} parent=1 // pred_region
      %s31 = ssub.s32 512, 512
      %32 = vsyncadd [#allocation6], %s31
      %s33 = sshll.u32 [#allocation5], 4
      %s34 = int_to_ptr.vmem [resolvable:$true] %s33
      %39 = dma.hbm_to_vmem [thread:$0]  %s1, 512, %s34, [#allocation6], 128, 128, 8
    $region9: #{tpu_custom_call.1} parent=1 // pred_fallthru
      _
    // Predicated region
    $region10: #{tpu_custom_call.1} parent=1 // pred_check
      _
    $region11: #{tpu_custom_call.1} parent=1 // pred_check_branch
      %41 = sbr.rel (0) target = $region13
    $region12: #{tpu_custom_call.1} parent=1 // pred_region
      %s43 = ssub.s32 512, 512
      %44 = vsyncadd [#allocation6], %s43
      %s45 = sshll.u32 [#allocation7], 4
      %s46 = int_to_ptr.vmem [resolvable:$true] %s45
      %51 = dma.hbm_to_vmem [thread:$0]  %s2, 512, %s46, [#allocation6], 128, 128, 8
    $region13: #{tpu_custom_call.1} parent=1 // pred_fallthru
      _
    // Predicated region
    $region14: #{tpu_custom_call.1} parent=1 // pred_check
      _
    $region15: #{tpu_custom_call.1} parent=1 // pred_check_branch
      %53 = sbr.rel (0) target = $region17
    $region16: #{tpu_custom_call.1} parent=1 // pred_region
      %s55 = ssub.s32 32, 32
      %56 = vsyncadd [#allocation9], %s55
      %s58 = sshll.u32 [#allocation8], 4
      %s59 = int_to_ptr.vmem [resolvable:$true] %s58
      %61 = dma.hbm_to_vmem [thread:$0]  %s3, 32, %s59, [#allocation9]
    $region17: #{tpu_custom_call.1} parent=1 // pred_fallthru
      _
    // Predicated region
    $region18: #{tpu_custom_call.1} parent=1 // pred_check
      _
    $region19: #{tpu_custom_call.1} parent=1 // pred_check_branch
      %63 = sbr.rel (0) target = $region21
    $region20: #{tpu_custom_call.1} parent=1 // pred_region
      %64 = dma.done [#allocation3], 512
    $region21: #{tpu_custom_call.1} parent=1 // pred_fallthru
      _
    // Predicated region
    $region22: #{tpu_custom_call.1} parent=1 // pred_check
      _
    $region23: #{tpu_custom_call.1} parent=1 // pred_check_branch
      %66 = sbr.rel (0) target = $region25
    $region24: #{tpu_custom_call.1} parent=1 // pred_region
      %67 = dma.done [#allocation6], 512
    $region25: #{tpu_custom_call.1} parent=1 // pred_fallthru
      _
    // Predicated region
    $region26: #{tpu_custom_call.1} parent=1 // pred_check
      _
    $region27: #{tpu_custom_call.1} parent=1 // pred_check_branch
      %69 = sbr.rel (0) target = $region29
    $region28: #{tpu_custom_call.1} parent=1 // pred_region
      %70 = dma.done [#allocation6], 512
    $region29: #{tpu_custom_call.1} parent=1 // pred_fallthru
      _
    // Predicated region
    $region30: #{tpu_custom_call.1} parent=1 // pred_check
      _
    $region31: #{tpu_custom_call.1} parent=1 // pred_check_branch
      %72 = sbr.rel (0) target = $region33
    $region32: #{tpu_custom_call.1} parent=1 // pred_region
      %73 = dma.done [#allocation9], 32
    $region33: #{tpu_custom_call.1} parent=1 // pred_fallthru
      _
    %v76 = vld [vmem:[#allocation2] sm:$0xff]
    %v77 = vld [vmem:[#allocation2 + $0x8] sm:$0xff]
    %v78 = vld [vmem:[#allocation2 + $0x10] sm:$0xff]
    %v79 = vld [vmem:[#allocation2 + $0x18] sm:$0xff]
    %v80 = vld [vmem:[#allocation5] sm:$0xff]
    %v81 = vld [vmem:[#allocation5 + $0x8] sm:$0xff]
    %v82 = vld [vmem:[#allocation5 + $0x10] sm:$0xff]
    %v83 = vld [vmem:[#allocation5 + $0x18] sm:$0xff]
    %v84 = vld [vmem:[#allocation7] sm:$0xff]
    %v85 = vld [vmem:[#allocation7 + $0x8] sm:$0xff]
    %v86 = vld [vmem:[#allocation7 + $0x10] sm:$0xff]
    %v87 = vld [vmem:[#allocation7 + $0x18] sm:$0xff]
    %v88 = vld [vmem:[#allocation8] sm:$0x3]
    %v89 = vmul.f32 %v76, 0.125
    %v90 = vmul.f32 %v77, 0.125
    %v91 = vmul.f32 %v78, 0.125
    %v92 = vmul.f32 %v79, 0.125
    %vm93 = vcmask 523264
    %v95 = vsel %vm93, %v89, 0
    %v98 = vsel %vm93, %v80, 0
    %100 = vmatprep.subr.mxu0 0.0
    %101 = vmatpush1.xpose.msra.mxu0 %v98
    %102 = vmatprep.subr.mxu0 0.0
    %103 = vmatpush1.xpose.msra.mxu0 0.0
    %104 = vmatprep.subr.mxu0 0.0
    %105 = vmatpush1.xpose.msra.mxu0 0.0
    %106 = vmatprep.subr.mxu0 0.0
    %107 = vmatpush1.xpose.msra.mxu0 0.0
    %108 = vmatprep.subr.mxu0 0.0
    %109 = vmatpush1.xpose.msra.mxu0 0.0
    %110 = vmatprep.subr.mxu0 0.0
    %111 = vmatpush1.xpose.msra.mxu0 0.0
    %112 = vmatprep.subr.mxu0 0.0
    %113 = vmatpush1.xpose.msra.mxu0 0.0
    %114 = vmatprep.subr.mxu0 0.0
    %115 = vmatpush1.xpose.msra.mxu0 0.0
    %116 = vmatprep.subr.mxu0 0.0
    %117 = vmatpush1.xpose.msra.mxu0 0.0
    %118 = vmatprep.subr.mxu0 0.0
    %119 = vmatpush1.xpose.msra.mxu0 0.0
    %120 = vmatprep.subr.mxu0 0.0
    %121 = vmatpush1.xpose.msra.mxu0 0.0
    %122 = vmatprep.subr.mxu0 0.0
    %123 = vmatpush1.xpose.msra.mxu0 0.0
    %124 = vmatprep.subr.mxu0 0.0
    %125 = vmatpush1.xpose.msra.mxu0 0.0
    %126 = vmatprep.subr.mxu0 0.0
    %127 = vmatpush1.xpose.msra.mxu0 0.0
    %128 = vmatprep.subr.mxu0 0.0
    %129 = vmatpush1.xpose.msra.mxu0 0.0
    %130 = vmatprep.subr.mxu0 0.0
    %131 = vmatpush1.xpose.msra.mxu0 0.0
    %132 = vmatprep.subr.mxu0 0.0
    %133 = vmatpush1.xpose.msra.mxu0 0.0
    %134 = vmatprep.subr.mxu0 0.0
    %135 = vmatpush1.xpose.msra.mxu0 0.0
    %136 = vmatprep.subr.mxu0 0.0
    %137 = vmatpush1.xpose.msra.mxu0 0.0
    %138 = vmatprep.subr.mxu0 0.0
    %139 = vmatpush1.xpose.msra.mxu0 0.0
    %140 = vmatprep.subr.mxu0 0.0
    %141 = vmatpush1.xpose.msra.mxu0 0.0
    %142 = vmatprep.subr.mxu0 0.0
    %143 = vmatpush1.xpose.msra.mxu0 0.0
    %144 = vmatprep.subr.mxu0 0.0
    %145 = vmatpush1.xpose.msra.mxu0 0.0
    %146 = vmatprep.subr.mxu0 0.0
    %147 = vmatpush1.xpose.msra.mxu0 0.0
    %148 = vmatprep.subr.mxu0 0.0
    %149 = vmatpush1.xpose.msra.mxu0 0.0
    %150 = vmatprep.subr.mxu0 0.0
    %151 = vmatpush1.xpose.msra.mxu0 0.0
    %152 = vmatprep.subr.mxu0 0.0
    %153 = vmatpush1.xpose.msra.mxu0 0.0
    %154 = vmatprep.subr.mxu0 0.0
    %155 = vmatpush1.xpose.msra.mxu0 0.0
    %156 = vmatprep.subr.mxu0 0.0
    %157 = vmatpush1.xpose.msra.mxu0 0.0
    %158 = vmatprep.subr.mxu0 0.0
    %159 = vmatpush1.xpose.msra.mxu0 0.0
    %160 = vmatprep.subr.mxu0 0.0
    %161 = vmatpush1.xpose.msra.mxu0 0.0
    %162 = vmatprep.subr.mxu0 0.0
    %163 = vmatpush1.xpose.msra.mxu0 0.0
    %164 = vmatprep.mubr.f32.mxu0 0.0
    %165 = vmatmul.mubr.f32.gmra.mrb[0].mxu0 %v95
    %v166 = vpop.f32.mrb[0].mxu0
    %v167 = vadd.f32 0.0, %v166
    %v168 = vpop.f32.mrb[0].mxu0
    %169 = vdwg.mxu0
    %v171 = vsel %vm93, %v90, 0
    %v174 = vsel %vm93, %v81, 0
    %176 = vmatprep.subr.mxu0 0.0
    %177 = vmatpush1.xpose.msra.mxu0 %v174
    %178 = vmatprep.subr.mxu0 0.0
    %179 = vmatpush1.xpose.msra.mxu0 0.0
    %180 = vmatprep.subr.mxu0 0.0
    %181 = vmatpush1.xpose.msra.mxu0 0.0
    %182 = vmatprep.subr.mxu0 0.0
    %183 = vmatpush1.xpose.msra.mxu0 0.0
    %184 = vmatprep.subr.mxu0 0.0
    %185 = vmatpush1.xpose.msra.mxu0 0.0
    %186 = vmatprep.subr.mxu0 0.0
    %187 = vmatpush1.xpose.msra.mxu0 0.0
    %188 = vmatprep.subr.mxu0 0.0
    %189 = vmatpush1.xpose.msra.mxu0 0.0
    %190 = vmatprep.subr.mxu0 0.0
    %191 = vmatpush1.xpose.msra.mxu0 0.0
    %192 = vmatprep.subr.mxu0 0.0
    %193 = vmatpush1.xpose.msra.mxu0 0.0
    %194 = vmatprep.subr.mxu0 0.0
    %195 = vmatpush1.xpose.msra.mxu0 0.0
    %196 = vmatprep.subr.mxu0 0.0
    %197 = vmatpush1.xpose.msra.mxu0 0.0
    %198 = vmatprep.subr.mxu0 0.0
    %199 = vmatpush1.xpose.msra.mxu0 0.0
    %200 = vmatprep.subr.mxu0 0.0
    %201 = vmatpush1.xpose.msra.mxu0 0.0
    %202 = vmatprep.subr.mxu0 0.0
    %203 = vmatpush1.xpose.msra.mxu0 0.0
    %204 = vmatprep.subr.mxu0 0.0
    %205 = vmatpush1.xpose.msra.mxu0 0.0
    %206 = vmatprep.subr.mxu0 0.0
    %207 = vmatpush1.xpose.msra.mxu0 0.0
    %208 = vmatprep.subr.mxu0 0.0
    %209 = vmatpush1.xpose.msra.mxu0 0.0
    %210 = vmatprep.subr.mxu0 0.0
    %211 = vmatpush1.xpose.msra.mxu0 0.0
    %212 = vmatprep.subr.mxu0 0.0
    %213 = vmatpush1.xpose.msra.mxu0 0.0
    %214 = vmatprep.subr.mxu0 0.0
    %215 = vmatpush1.xpose.msra.mxu0 0.0
    %216 = vmatprep.subr.mxu0 0.0
    %217 = vmatpush1.xpose.msra.mxu0 0.0
    %218 = vmatprep.subr.mxu0 0.0
    %219 = vmatpush1.xpose.msra.mxu0 0.0
    %220 = vmatprep.subr.mxu0 0.0
    %221 = vmatpush1.xpose.msra.mxu0 0.0
    %222 = vmatprep.subr.mxu0 0.0
    %223 = vmatpush1.xpose.msra.mxu0 0.0
    %224 = vmatprep.subr.mxu0 0.0
    %225 = vmatpush1.xpose.msra.mxu0 0.0
    %226 = vmatprep.subr.mxu0 0.0
    %227 = vmatpush1.xpose.msra.mxu0 0.0
    %228 = vmatprep.subr.mxu0 0.0
    %229 = vmatpush1.xpose.msra.mxu0 0.0
    %230 = vmatprep.subr.mxu0 0.0
    %231 = vmatpush1.xpose.msra.mxu0 0.0
    %232 = vmatprep.subr.mxu0 0.0
    %233 = vmatpush1.xpose.msra.mxu0 0.0
    %234 = vmatprep.subr.mxu0 0.0
    %235 = vmatpush1.xpose.msra.mxu0 0.0
    %236 = vmatprep.subr.mxu0 0.0
    %237 = vmatpush1.xpose.msra.mxu0 0.0
    %238 = vmatprep.subr.mxu0 0.0
    %239 = vmatpush1.xpose.msra.mxu0 0.0
    %240 = vmatprep.mubr.f32.mxu0 0.0
    %241 = vmatmul.mubr.f32.gmra.mrb[0].mxu0 %v171
    %v242 = vpop.f32.mrb[0].mxu0
    %v243 = vadd.f32 0.0, %v242
    %v244 = vpop.f32.mrb[0].mxu0
    %245 = vdwg.mxu0
    %v247 = vsel %vm93, %v91, 0
    %v250 = vsel %vm93, %v82, 0
    %252 = vmatprep.subr.mxu0 0.0
    %253 = vmatpush1.xpose.msra.mxu0 %v250
    %254 = vmatprep.subr.mxu0 0.0
    %255 = vmatpush1.xpose.msra.mxu0 0.0
    %256 = vmatprep.subr.mxu0 0.0
    %257 = vmatpush1.xpose.msra.mxu0 0.0
    %258 = vmatprep.subr.mxu0 0.0
    %259 = vmatpush1.xpose.msra.mxu0 0.0
    %260 = vmatprep.subr.mxu0 0.0
    %261 = vmatpush1.xpose.msra.mxu0 0.0
    %262 = vmatprep.subr.mxu0 0.0
    %263 = vmatpush1.xpose.msra.mxu0 0.0
    %264 = vmatprep.subr.mxu0 0.0
    %265 = vmatpush1.xpose.msra.mxu0 0.0
    %266 = vmatprep.subr.mxu0 0.0
    %267 = vmatpush1.xpose.msra.mxu0 0.0
    %268 = vmatprep.subr.mxu0 0.0
    %269 = vmatpush1.xpose.msra.mxu0 0.0
    %270 = vmatprep.subr.mxu0 0.0
    %271 = vmatpush1.xpose.msra.mxu0 0.0
    %272 = vmatprep.subr.mxu0 0.0
    %273 = vmatpush1.xpose.msra.mxu0 0.0
    %274 = vmatprep.subr.mxu0 0.0
    %275 = vmatpush1.xpose.msra.mxu0 0.0
    %276 = vmatprep.subr.mxu0 0.0
    %277 = vmatpush1.xpose.msra.mxu0 0.0
    %278 = vmatprep.subr.mxu0 0.0
    %279 = vmatpush1.xpose.msra.mxu0 0.0
    %280 = vmatprep.subr.mxu0 0.0
    %281 = vmatpush1.xpose.msra.mxu0 0.0
    %282 = vmatprep.subr.mxu0 0.0
    %283 = vmatpush1.xpose.msra.mxu0 0.0
    %284 = vmatprep.subr.mxu0 0.0
    %285 = vmatpush1.xpose.msra.mxu0 0.0
    %286 = vmatprep.subr.mxu0 0.0
    %287 = vmatpush1.xpose.msra.mxu0 0.0
    %288 = vmatprep.subr.mxu0 0.0
    %289 = vmatpush1.xpose.msra.mxu0 0.0
    %290 = vmatprep.subr.mxu0 0.0
    %291 = vmatpush1.xpose.msra.mxu0 0.0
    %292 = vmatprep.subr.mxu0 0.0
    %293 = vmatpush1.xpose.msra.mxu0 0.0
    %294 = vmatprep.subr.mxu0 0.0
    %295 = vmatpush1.xpose.msra.mxu0 0.0
    %296 = vmatprep.subr.mxu0 0.0
    %297 = vmatpush1.xpose.msra.mxu0 0.0
    %298 = vmatprep.subr.mxu0 0.0
    %299 = vmatpush1.xpose.msra.mxu0 0.0
    %300 = vmatprep.subr.mxu0 0.0
    %301 = vmatpush1.xpose.msra.mxu0 0.0
    %302 = vmatprep.subr.mxu0 0.0
    %303 = vmatpush1.xpose.msra.mxu0 0.0
    %304 = vmatprep.subr.mxu0 0.0
    %305 = vmatpush1.xpose.msra.mxu0 0.0
    %306 = vmatprep.subr.mxu0 0.0
    %307 = vmatpush1.xpose.msra.mxu0 0.0
    %308 = vmatprep.subr.mxu0 0.0
    %309 = vmatpush1.xpose.msra.mxu0 0.0
    %310 = vmatprep.subr.mxu0 0.0
    %311 = vmatpush1.xpose.msra.mxu0 0.0
    %312 = vmatprep.subr.mxu0 0.0
    %313 = vmatpush1.xpose.msra.mxu0 0.0
    %314 = vmatprep.subr.mxu0 0.0
    %315 = vmatpush1.xpose.msra.mxu0 0.0
    %316 = vmatprep.mubr.f32.mxu0 0.0
    %317 = vmatmul.mubr.f32.gmra.mrb[0].mxu0 %v247
    %v318 = vpop.f32.mrb[0].mxu0
    %v319 = vadd.f32 0.0, %v318
    %v320 = vpop.f32.mrb[0].mxu0
    %321 = vdwg.mxu0
    %v323 = vsel %vm93, %v92, 0
    %v326 = vsel %vm93, %v83, 0
    %328 = vmatprep.subr.mxu0 0.0
    %329 = vmatpush1.xpose.msra.mxu0 %v326
    %330 = vmatprep.subr.mxu0 0.0
    %331 = vmatpush1.xpose.msra.mxu0 0.0
    %332 = vmatprep.subr.mxu0 0.0
    %333 = vmatpush1.xpose.msra.mxu0 0.0
    %334 = vmatprep.subr.mxu0 0.0
    %335 = vmatpush1.xpose.msra.mxu0 0.0
    %336 = vmatprep.subr.mxu0 0.0
    %337 = vmatpush1.xpose.msra.mxu0 0.0
    %338 = vmatprep.subr.mxu0 0.0
    %339 = vmatpush1.xpose.msra.mxu0 0.0
    %340 = vmatprep.subr.mxu0 0.0
    %341 = vmatpush1.xpose.msra.mxu0 0.0
    %342 = vmatprep.subr.mxu0 0.0
    %343 = vmatpush1.xpose.msra.mxu0 0.0
    %344 = vmatprep.subr.mxu0 0.0
    %345 = vmatpush1.xpose.msra.mxu0 0.0
    %346 = vmatprep.subr.mxu0 0.0
    %347 = vmatpush1.xpose.msra.mxu0 0.0
    %348 = vmatprep.subr.mxu0 0.0
    %349 = vmatpush1.xpose.msra.mxu0 0.0
    %350 = vmatprep.subr.mxu0 0.0
    %351 = vmatpush1.xpose.msra.mxu0 0.0
    %352 = vmatprep.subr.mxu0 0.0
    %353 = vmatpush1.xpose.msra.mxu0 0.0
    %354 = vmatprep.subr.mxu0 0.0
    %355 = vmatpush1.xpose.msra.mxu0 0.0
    %356 = vmatprep.subr.mxu0 0.0
    %357 = vmatpush1.xpose.msra.mxu0 0.0
    %358 = vmatprep.subr.mxu0 0.0
    %359 = vmatpush1.xpose.msra.mxu0 0.0
    %360 = vmatprep.subr.mxu0 0.0
    %361 = vmatpush1.xpose.msra.mxu0 0.0
    %362 = vmatprep.subr.mxu0 0.0
    %363 = vmatpush1.xpose.msra.mxu0 0.0
    %364 = vmatprep.subr.mxu0 0.0
    %365 = vmatpush1.xpose.msra.mxu0 0.0
    %366 = vmatprep.subr.mxu0 0.0
    %367 = vmatpush1.xpose.msra.mxu0 0.0
    %368 = vmatprep.subr.mxu0 0.0
    %369 = vmatpush1.xpose.msra.mxu0 0.0
    %370 = vmatprep.subr.mxu0 0.0
    %371 = vmatpush1.xpose.msra.mxu0 0.0
    %372 = vmatprep.subr.mxu0 0.0
    %373 = vmatpush1.xpose.msra.mxu0 0.0
    %374 = vmatprep.subr.mxu0 0.0
    %375 = vmatpush1.xpose.msra.mxu0 0.0
    %376 = vmatprep.subr.mxu0 0.0
    %377 = vmatpush1.xpose.msra.mxu0 0.0
    %378 = vmatprep.subr.mxu0 0.0
    %379 = vmatpush1.xpose.msra.mxu0 0.0
    %380 = vmatprep.subr.mxu0 0.0
    %381 = vmatpush1.xpose.msra.mxu0 0.0
    %382 = vmatprep.subr.mxu0 0.0
    %383 = vmatpush1.xpose.msra.mxu0 0.0
    %384 = vmatprep.subr.mxu0 0.0
    %385 = vmatpush1.xpose.msra.mxu0 0.0
    %386 = vmatprep.subr.mxu0 0.0
    %387 = vmatpush1.xpose.msra.mxu0 0.0
    %388 = vmatprep.subr.mxu0 0.0
    %389 = vmatpush1.xpose.msra.mxu0 0.0
    %390 = vmatprep.subr.mxu0 0.0
    %391 = vmatpush1.xpose.msra.mxu0 0.0
    %392 = vmatprep.mubr.f32.mxu0 0.0
    %393 = vmatmul.mubr.f32.gmra.mrb[0].mxu0 %v323
    %v394 = vpop.f32.mrb[0].mxu0
    %v395 = vadd.f32 0.0, %v394
    %v396 = vpop.f32.mrb[0].mxu0
    %397 = vdwg.mxu0
    %vm398 = vnez %v88
    %v399 = vsel %vm398, 16843009, 0
    %v400 = vunpack.c.0.s8 %v399
    %vm401 = vcmp.ne.s32.totalorder %v400, 0
    %v402 = vsel %vm401, 1, 0
    %vm403 = vcmp.eq.s32.totalorder %v402, 1
    %v404 = vsel %vm403, -1e+09, %v167
    %v405 = vsel %vm403, -1e+09, %v243
    %v406 = vsel %vm403, -1e+09, %v319
    %v407 = vsel %vm403, -1e+09, %v395
    %vm408 = vcmask 64512
    %v409 = vsel %vm408, %v404, -inf
    %410 = vmax.xlane.f32.xlu0 %v409
    %v411 = vpop.xlane.xlu0 %410
    %v412 = vsel %vm408, %v405, -inf
    %413 = vmax.xlane.f32.xlu0 %v412
    %v414 = vpop.xlane.xlu0 %413
    %v415 = vsel %vm408, %v406, -inf
    %416 = vmax.xlane.f32.xlu0 %v415
    %v417 = vpop.xlane.xlu0 %416
    %v418 = vsel %vm408, %v407, -inf
    %419 = vmax.xlane.f32.xlu0 %v418
    %v420 = vpop.xlane.xlu0 %419
    %v421 = vsub.f32 %v404, %v411
    %v422 = vsub.f32 %v405, %v414
    %v423 = vsub.f32 %v406, %v417
    %v424 = vsub.f32 %v407, %v420
    %v425 = vmul.f32 %v421, 1.442695
    %v426 = vpow.pop %v425
    %v427 = vmul.f32 %v422, 1.442695
    %v428 = vpow.pop %v427
    %v429 = vmul.f32 %v423, 1.442695
    %v430 = vpow.pop %v429
    %v431 = vmul.f32 %v424, 1.442695
    %v432 = vpow.pop %v431
    %v433 = vsel %vm408, %v426, 0.0
    %434 = vadd.xlane.f32.xlu0 %v433
    %v435 = vpop.xlane.xlu0 %434
    %v436 = vsel %vm408, %v428, 0.0
    %437 = vadd.xlane.f32.xlu0 %v436
    %v438 = vpop.xlane.xlu0 %437
    %v439 = vsel %vm408, %v430, 0.0
    %440 = vadd.xlane.f32.xlu0 %v439
    %v441 = vpop.xlane.xlu0 %440
    %v442 = vsel %vm408, %v432, 0.0
    %443 = vadd.xlane.f32.xlu0 %v442
    %v444 = vpop.xlane.xlu0 %443
    %v445 = vrcp.pop %v435
    %v446 = vrcp.pop %v438
    %v447 = vrcp.pop %v441
    %v448 = vrcp.pop %v444
    %v449 = vmul.f32 %v426, %v445
    %v450 = vmul.f32 %v428, %v446
    %v451 = vmul.f32 %v430, %v447
    %v452 = vmul.f32 %v432, %v448
    %453 = vst.msk [vmem:[#allocation11] sm:$0xff] %vm408, %v449
    %454 = vst.msk [vmem:[#allocation11 + $0x8] sm:$0xff] %vm408, %v450
    %455 = vst.msk [vmem:[#allocation11 + $0x10] sm:$0xff] %vm408, %v451
    %456 = vst.msk [vmem:[#allocation11 + $0x18] sm:$0xff] %vm408, %v452
    %v458 = vsel %vm408, %v449, 0
    %460 = vmatprep.subr.mxu0 0.0
    %461 = vmatpush1.msra.mxu0 %v84
    %462 = vmatprep.subr.mxu0 0.0
    %463 = vmatpush1.msra.mxu0 0.0
    %464 = vmatprep.subr.mxu0 0.0
    %465 = vmatpush1.msra.mxu0 0.0
    %466 = vmatprep.subr.mxu0 0.0
    %467 = vmatpush1.msra.mxu0 0.0
    %468 = vmatprep.subr.mxu0 0.0
    %469 = vmatpush1.msra.mxu0 0.0
    %470 = vmatprep.subr.mxu0 0.0
    %471 = vmatpush1.msra.mxu0 0.0
    %472 = vmatprep.subr.mxu0 0.0
    %473 = vmatpush1.msra.mxu0 0.0
    %474 = vmatprep.subr.mxu0 0.0
    %475 = vmatpush1.msra.mxu0 0.0
    %476 = vmatprep.subr.mxu0 0.0
    %477 = vmatpush1.msra.mxu0 0.0
    %478 = vmatprep.subr.mxu0 0.0
    %479 = vmatpush1.msra.mxu0 0.0
    %480 = vmatprep.subr.mxu0 0.0
    %481 = vmatpush1.msra.mxu0 0.0
    %482 = vmatprep.subr.mxu0 0.0
    %483 = vmatpush1.msra.mxu0 0.0
    %484 = vmatprep.subr.mxu0 0.0
    %485 = vmatpush1.msra.mxu0 0.0
    %486 = vmatprep.subr.mxu0 0.0
    %487 = vmatpush1.msra.mxu0 0.0
    %488 = vmatprep.subr.mxu0 0.0
    %489 = vmatpush1.msra.mxu0 0.0
    %490 = vmatprep.subr.mxu0 0.0
    %491 = vmatpush1.msra.mxu0 0.0
    %492 = vmatprep.subr.mxu0 0.0
    %493 = vmatpush1.msra.mxu0 0.0
    %494 = vmatprep.subr.mxu0 0.0
    %495 = vmatpush1.msra.mxu0 0.0
    %496 = vmatprep.subr.mxu0 0.0
    %497 = vmatpush1.msra.mxu0 0.0
    %498 = vmatprep.subr.mxu0 0.0
    %499 = vmatpush1.msra.mxu0 0.0
    %500 = vmatprep.subr.mxu0 0.0
    %501 = vmatpush1.msra.mxu0 0.0
    %502 = vmatprep.subr.mxu0 0.0
    %503 = vmatpush1.msra.mxu0 0.0
    %504 = vmatprep.subr.mxu0 0.0
    %505 = vmatpush1.msra.mxu0 0.0
    %506 = vmatprep.subr.mxu0 0.0
    %507 = vmatpush1.msra.mxu0 0.0
    %508 = vmatprep.subr.mxu0 0.0
    %509 = vmatpush1.msra.mxu0 0.0
    %510 = vmatprep.subr.mxu0 0.0
    %511 = vmatpush1.msra.mxu0 0.0
    %512 = vmatprep.subr.mxu0 0.0
    %513 = vmatpush1.msra.mxu0 0.0
    %514 = vmatprep.subr.mxu0 0.0
    %515 = vmatpush1.msra.mxu0 0.0
    %516 = vmatprep.subr.mxu0 0.0
    %517 = vmatpush1.msra.mxu0 0.0
    %518 = vmatprep.subr.mxu0 0.0
    %519 = vmatpush1.msra.mxu0 0.0
    %520 = vmatprep.subr.mxu0 0.0
    %521 = vmatpush1.msra.mxu0 0.0
    %522 = vmatprep.subr.mxu0 0.0
    %523 = vmatpush1.msra.mxu0 0.0
    %524 = vmatprep.mubr.f32.mxu0 0.0
    %525 = vmatmul.mubr.f32.gmra.mrb[0].mxu0 %v458
    %v526 = vpop.f32.mrb[0].mxu0
    %v527 = vadd.f32 0.0, %v526
    %v528 = vpop.f32.mrb[0].mxu0
    %529 = vdwg.mxu0
    %v531 = vsel %vm408, %v450, 0
    %533 = vmatprep.subr.mxu0 0.0
    %534 = vmatpush1.msra.mxu0 %v85
    %535 = vmatprep.subr.mxu0 0.0
    %536 = vmatpush1.msra.mxu0 0.0
    %537 = vmatprep.subr.mxu0 0.0
    %538 = vmatpush1.msra.mxu0 0.0
    %539 = vmatprep.subr.mxu0 0.0
    %540 = vmatpush1.msra.mxu0 0.0
    %541 = vmatprep.subr.mxu0 0.0
    %542 = vmatpush1.msra.mxu0 0.0
    %543 = vmatprep.subr.mxu0 0.0
    %544 = vmatpush1.msra.mxu0 0.0
    %545 = vmatprep.subr.mxu0 0.0
    %546 = vmatpush1.msra.mxu0 0.0
    %547 = vmatprep.subr.mxu0 0.0
    %548 = vmatpush1.msra.mxu0 0.0
    %549 = vmatprep.subr.mxu0 0.0
    %550 = vmatpush1.msra.mxu0 0.0
    %551 = vmatprep.subr.mxu0 0.0
    %552 = vmatpush1.msra.mxu0 0.0
    %553 = vmatprep.subr.mxu0 0.0
    %554 = vmatpush1.msra.mxu0 0.0
    %555 = vmatprep.subr.mxu0 0.0
    %556 = vmatpush1.msra.mxu0 0.0
    %557 = vmatprep.subr.mxu0 0.0
    %558 = vmatpush1.msra.mxu0 0.0
    %559 = vmatprep.subr.mxu0 0.0
    %560 = vmatpush1.msra.mxu0 0.0
    %561 = vmatprep.subr.mxu0 0.0
    %562 = vmatpush1.msra.mxu0 0.0
    %563 = vmatprep.subr.mxu0 0.0
    %564 = vmatpush1.msra.mxu0 0.0
    %565 = vmatprep.subr.mxu0 0.0
    %566 = vmatpush1.msra.mxu0 0.0
    %567 = vmatprep.subr.mxu0 0.0
    %568 = vmatpush1.msra.mxu0 0.0
    %569 = vmatprep.subr.mxu0 0.0
    %570 = vmatpush1.msra.mxu0 0.0
    %571 = vmatprep.subr.mxu0 0.0
    %572 = vmatpush1.msra.mxu0 0.0
    %573 = vmatprep.subr.mxu0 0.0
    %574 = vmatpush1.msra.mxu0 0.0
    %575 = vmatprep.subr.mxu0 0.0
    %576 = vmatpush1.msra.mxu0 0.0
    %577 = vmatprep.subr.mxu0 0.0
    %578 = vmatpush1.msra.mxu0 0.0
    %579 = vmatprep.subr.mxu0 0.0
    %580 = vmatpush1.msra.mxu0 0.0
    %581 = vmatprep.subr.mxu0 0.0
    %582 = vmatpush1.msra.mxu0 0.0
    %583 = vmatprep.subr.mxu0 0.0
    %584 = vmatpush1.msra.mxu0 0.0
    %585 = vmatprep.subr.mxu0 0.0
    %586 = vmatpush1.msra.mxu0 0.0
    %587 = vmatprep.subr.mxu0 0.0
    %588 = vmatpush1.msra.mxu0 0.0
    %589 = vmatprep.subr.mxu0 0.0
    %590 = vmatpush1.msra.mxu0 0.0
    %591 = vmatprep.subr.mxu0 0.0
    %592 = vmatpush1.msra.mxu0 0.0
    %593 = vmatprep.subr.mxu0 0.0
    %594 = vmatpush1.msra.mxu0 0.0
    %595 = vmatprep.subr.mxu0 0.0
    %596 = vmatpush1.msra.mxu0 0.0
    %597 = vmatprep.mubr.f32.mxu0 0.0
    %598 = vmatmul.mubr.f32.gmra.mrb[0].mxu0 %v531
    %v599 = vpop.f32.mrb[0].mxu0
    %v600 = vadd.f32 0.0, %v599
    %v601 = vpop.f32.mrb[0].mxu0
    %602 = vdwg.mxu0
    %v604 = vsel %vm408, %v451, 0
    %606 = vmatprep.subr.mxu0 0.0
    %607 = vmatpush1.msra.mxu0 %v86
    %608 = vmatprep.subr.mxu0 0.0
    %609 = vmatpush1.msra.mxu0 0.0
    %610 = vmatprep.subr.mxu0 0.0
    %611 = vmatpush1.msra.mxu0 0.0
    %612 = vmatprep.subr.mxu0 0.0
    %613 = vmatpush1.msra.mxu0 0.0
    %614 = vmatprep.subr.mxu0 0.0
    %615 = vmatpush1.msra.mxu0 0.0
    %616 = vmatprep.subr.mxu0 0.0
    %617 = vmatpush1.msra.mxu0 0.0
    %618 = vmatprep.subr.mxu0 0.0
    %619 = vmatpush1.msra.mxu0 0.0
    %620 = vmatprep.subr.mxu0 0.0
    %621 = vmatpush1.msra.mxu0 0.0
    %622 = vmatprep.subr.mxu0 0.0
    %623 = vmatpush1.msra.mxu0 0.0
    %624 = vmatprep.subr.mxu0 0.0
    %625 = vmatpush1.msra.mxu0 0.0
    %626 = vmatprep.subr.mxu0 0.0
    %627 = vmatpush1.msra.mxu0 0.0
    %628 = vmatprep.subr.mxu0 0.0
    %629 = vmatpush1.msra.mxu0 0.0
    %630 = vmatprep.subr.mxu0 0.0
    %631 = vmatpush1.msra.mxu0 0.0
    %632 = vmatprep.subr.mxu0 0.0
    %633 = vmatpush1.msra.mxu0 0.0
    %634 = vmatprep.subr.mxu0 0.0
    %635 = vmatpush1.msra.mxu0 0.0
    %636 = vmatprep.subr.mxu0 0.0
    %637 = vmatpush1.msra.mxu0 0.0
    %638 = vmatprep.subr.mxu0 0.0
    %639 = vmatpush1.msra.mxu0 0.0
    %640 = vmatprep.subr.mxu0 0.0
    %641 = vmatpush1.msra.mxu0 0.0
    %642 = vmatprep.subr.mxu0 0.0
    %643 = vmatpush1.msra.mxu0 0.0
    %644 = vmatprep.subr.mxu0 0.0
    %645 = vmatpush1.msra.mxu0 0.0
    %646 = vmatprep.subr.mxu0 0.0
    %647 = vmatpush1.msra.mxu0 0.0
    %648 = vmatprep.subr.mxu0 0.0
    %649 = vmatpush1.msra.mxu0 0.0
    %650 = vmatprep.subr.mxu0 0.0
    %651 = vmatpush1.msra.mxu0 0.0
    %652 = vmatprep.subr.mxu0 0.0
    %653 = vmatpush1.msra.mxu0 0.0
    %654 = vmatprep.subr.mxu0 0.0
    %655 = vmatpush1.msra.mxu0 0.0
    %656 = vmatprep.subr.mxu0 0.0
    %657 = vmatpush1.msra.mxu0 0.0
    %658 = vmatprep.subr.mxu0 0.0
    %659 = vmatpush1.msra.mxu0 0.0
    %660 = vmatprep.subr.mxu0 0.0
    %661 = vmatpush1.msra.mxu0 0.0
    %662 = vmatprep.subr.mxu0 0.0
    %663 = vmatpush1.msra.mxu0 0.0
    %664 = vmatprep.subr.mxu0 0.0
    %665 = vmatpush1.msra.mxu0 0.0
    %666 = vmatprep.subr.mxu0 0.0
    %667 = vmatpush1.msra.mxu0 0.0
    %668 = vmatprep.subr.mxu0 0.0
    %669 = vmatpush1.msra.mxu0 0.0
    %670 = vmatprep.mubr.f32.mxu0 0.0
    %671 = vmatmul.mubr.f32.gmra.mrb[0].mxu0 %v604
    %v672 = vpop.f32.mrb[0].mxu0
    %v673 = vadd.f32 0.0, %v672
    %v674 = vpop.f32.mrb[0].mxu0
    %675 = vdwg.mxu0
    %v677 = vsel %vm408, %v452, 0
    %679 = vmatprep.subr.mxu0 0.0
    %680 = vmatpush1.msra.mxu0 %v87
    %681 = vmatprep.subr.mxu0 0.0
    %682 = vmatpush1.msra.mxu0 0.0
    %683 = vmatprep.subr.mxu0 0.0
    %684 = vmatpush1.msra.mxu0 0.0
    %685 = vmatprep.subr.mxu0 0.0
    %686 = vmatpush1.msra.mxu0 0.0
    %687 = vmatprep.subr.mxu0 0.0
    %688 = vmatpush1.msra.mxu0 0.0
    %689 = vmatprep.subr.mxu0 0.0
    %690 = vmatpush1.msra.mxu0 0.0
    %691 = vmatprep.subr.mxu0 0.0
    %692 = vmatpush1.msra.mxu0 0.0
    %693 = vmatprep.subr.mxu0 0.0
    %694 = vmatpush1.msra.mxu0 0.0
    %695 = vmatprep.subr.mxu0 0.0
    %696 = vmatpush1.msra.mxu0 0.0
    %697 = vmatprep.subr.mxu0 0.0
    %698 = vmatpush1.msra.mxu0 0.0
    %699 = vmatprep.subr.mxu0 0.0
    %700 = vmatpush1.msra.mxu0 0.0
    %701 = vmatprep.subr.mxu0 0.0
    %702 = vmatpush1.msra.mxu0 0.0
    %703 = vmatprep.subr.mxu0 0.0
    %704 = vmatpush1.msra.mxu0 0.0
    %705 = vmatprep.subr.mxu0 0.0
    %706 = vmatpush1.msra.mxu0 0.0
    %707 = vmatprep.subr.mxu0 0.0
    %708 = vmatpush1.msra.mxu0 0.0
    %709 = vmatprep.subr.mxu0 0.0
    %710 = vmatpush1.msra.mxu0 0.0
    %711 = vmatprep.subr.mxu0 0.0
    %712 = vmatpush1.msra.mxu0 0.0
    %713 = vmatprep.subr.mxu0 0.0
    %714 = vmatpush1.msra.mxu0 0.0
    %715 = vmatprep.subr.mxu0 0.0
    %716 = vmatpush1.msra.mxu0 0.0
    %717 = vmatprep.subr.mxu0 0.0
    %718 = vmatpush1.msra.mxu0 0.0
    %719 = vmatprep.subr.mxu0 0.0
    %720 = vmatpush1.msra.mxu0 0.0
    %721 = vmatprep.subr.mxu0 0.0
    %722 = vmatpush1.msra.mxu0 0.0
    %723 = vmatprep.subr.mxu0 0.0
    %724 = vmatpush1.msra.mxu0 0.0
    %725 = vmatprep.subr.mxu0 0.0
    %726 = vmatpush1.msra.mxu0 0.0
    %727 = vmatprep.subr.mxu0 0.0
    %728 = vmatpush1.msra.mxu0 0.0
    %729 = vmatprep.subr.mxu0 0.0
    %730 = vmatpush1.msra.mxu0 0.0
    %731 = vmatprep.subr.mxu0 0.0
    %732 = vmatpush1.msra.mxu0 0.0
    %733 = vmatprep.subr.mxu0 0.0
    %734 = vmatpush1.msra.mxu0 0.0
    %735 = vmatprep.subr.mxu0 0.0
    %736 = vmatpush1.msra.mxu0 0.0
    %737 = vmatprep.subr.mxu0 0.0
    %738 = vmatpush1.msra.mxu0 0.0
    %739 = vmatprep.subr.mxu0 0.0
    %740 = vmatpush1.msra.mxu0 0.0
    %741 = vmatprep.subr.mxu0 0.0
    %742 = vmatpush1.msra.mxu0 0.0
    %743 = vmatprep.mubr.f32.mxu0 0.0
    %744 = vmatmul.mubr.f32.gmra.mrb[0].mxu0 %v677
    %v745 = vpop.f32.mrb[0].mxu0
    %v746 = vadd.f32 0.0, %v745
    %v747 = vpop.f32.mrb[0].mxu0
    %748 = vdwg.mxu0
    %750 = vrot.lane.b32.xlu0 %v600, 64
    %v751 = vpop.permute.xlu0 %750
    %754 = vrot.lane.b32.xlu0 %v746, 64
    %v755 = vpop.permute.xlu0 %754
    %v757 = vsel %vm93, %v527, %v751
    %v758 = vsel %vm93, %v673, %v755
    %759 = vst [vmem:[#allocation10] sm:$0xff] %v757
    %760 = vst [vmem:[#allocation10 + $0x8] sm:$0xff] %v758
    // Predicated region
    $region34: #{tpu_custom_call.1} parent=1 // pred_check
      _
    $region35: #{tpu_custom_call.1} parent=1 // pred_check_branch
      %762 = sbr.rel (0) target = $region37
    $region36: #{tpu_custom_call.1} parent=1 // pred_region
      %s764 = ssub.s32 256, 256
      %765 = vsyncadd [#allocation4], %s764
      %s767 = sshll.u32 [#allocation10], 4
      %s768 = int_to_ptr.vmem [resolvable:$true] %s767
      %770 = dma.vmem_to_hbm [thread:$0]  %s768, 256, %s4, [#allocation4]
    $region37: #{tpu_custom_call.1} parent=1 // pred_fallthru
      _
    // Predicated region
    $region38: #{tpu_custom_call.1} parent=1 // pred_check
      _
    $region39: #{tpu_custom_call.1} parent=1 // pred_check_branch
      %772 = sbr.rel (0) target = $region41
    $region40: #{tpu_custom_call.1} parent=1 // pred_region
      %s774 = ssub.s32 512, 512
      %775 = vsyncadd [#allocation12], %s774
      %s776 = sshll.u32 [#allocation11], 4
      %s777 = int_to_ptr.vmem [resolvable:$true] %s776
      %782 = dma.vmem_to_hbm [thread:$0]  %s777, 512, %s5, [#allocation12], 128, 128, 8
    $region41: #{tpu_custom_call.1} parent=1 // pred_fallthru
      _
    // Predicated region
    $region42: #{tpu_custom_call.1} parent=1 // pred_check
      _
    $region43: #{tpu_custom_call.1} parent=1 // pred_check_branch
      %784 = sbr.rel (0) target = $region45
    $region44: #{tpu_custom_call.1} parent=1 // pred_region
      %785 = dma.done [#allocation4], 256
    $region45: #{tpu_custom_call.1} parent=1 // pred_fallthru
      _
    // Predicated region
    $region46: #{tpu_custom_call.1} parent=1 // pred_check
      _
    $region47: #{tpu_custom_call.1} parent=1 // pred_check_branch
      %787 = sbr.rel (0) target = $region49
    $region48: #{tpu_custom_call.1} parent=1 // pred_region
      %788 = dma.done [#allocation12], 512
    $region49: #{tpu_custom_call.1} parent=1 // pred_fallthru
      _
    %789 = vsyncpa [#allocation3], 1
    %790 = vsyncpa [#allocation6], 1
    %791 = vsyncpa [#allocation9], 1
    %792 = vsyncpa [#allocation4], 1
    %793 = vsyncpa [#allocation12], 1

</llo_original>
